<compile_context>
chip_gen: v6e
topology: v6e:2x2x1
jax: 0.10.0
libtpu: 0.0.40
codegen_flags: <defaults>
</compile_context>

<pallas_src>
import jax
import jax.numpy as jnp
from jax.experimental import pallas as pl
from jax.experimental.pallas import tpu as pltpu

_EPS = 1e-07
_LANES = 128
_MAX_TILE_R = 2048  # rows per grid step; 2048*128*4B = 1 MiB per input tile


def _make_bce_partial_kernel(tile_r: int, rows: int, needs_mask: bool):
    """Builds a kernel emitting a per-block (8, 128) partial sum of the BCE term."""

    def kernel(p_ref, t_ref, o_ref):
        p = p_ref[...].astype(jnp.float32)
        t = t_ref[...].astype(jnp.float32)

        if needs_mask:
            row0 = pl.program_id(0) * tile_r
            row_ids = jax.lax.broadcasted_iota(jnp.int32, (tile_r, _LANES), 0) + row0
            valid = row_ids < rows
            # Keep garbage rows of the ragged last block out of log().
            p = jnp.where(valid, p, 0.5)

        p = jnp.clip(p, _EPS, 1.0 - _EPS)
        term = t * jnp.log(p) + (1.0 - t) * jnp.log(1.0 - p)

        if needs_mask:
            term = jnp.where(valid, term, 0.0)

        # Fold (tile_r, 128) -> (8, 128): tile-aligned reshape, pure VPU adds,
        # exactly one (8, 128) store per grid step.
        o_ref[0] = jnp.sum(term.reshape(tile_r // 8, 8, _LANES), axis=0)

    return kernel


def _term_sum_jnp(p, t):
    """Plain-jnp sum of the (positive) BCE term, for the < 128-element tail."""
    p = jnp.clip(p.astype(jnp.float32), _EPS, 1.0 - _EPS)
    t = t.astype(jnp.float32)
    return jnp.sum(t * jnp.log(p) + (1.0 - t) * jnp.log(1.0 - p))


@jax.jit
def bce_loss(y_pred: jax.Array, y_true: jax.Array) -> jax.Array:
    assert y_pred.shape == y_true.shape, "y_pred and y_true must have the same shape"

    n = y_pred.size
    p_flat = y_pred.reshape(-1)
    t_flat = y_true.reshape(-1)

    n_main = (n // _LANES) * _LANES
    rows = n_main // _LANES

    total = jnp.float32(0.0)

    # Tail (< 128 elements): handled with plain jnp, summed into the result.
    if n_main < n:
        total = total + _term_sum_jnp(p_flat[n_main:], t_flat[n_main:])

    if rows > 0:
        if rows >= _MAX_TILE_R:
            tile_r = _MAX_TILE_R
        else:
            tile_r = ((rows + 7) // 8) * 8  # multiple of 8 sublanes
        num_blocks = pl.cdiv(rows, tile_r)
        needs_mask = (rows % tile_r) != 0

        p2 = p_flat[:n_main].reshape(rows, _LANES)
        t2 = t_flat[:n_main].reshape(rows, _LANES)

        in_spec = pl.BlockSpec((tile_r, _LANES), lambda i: (i, 0))
        out_spec = pl.BlockSpec((1, 8, _LANES), lambda i: (i, 0, 0))

        partials = pl.pallas_call(
            _make_bce_partial_kernel(tile_r, rows, needs_mask),
            out_shape=jax.ShapeDtypeStruct((num_blocks, 8, _LANES), jnp.float32),
            grid=(num_blocks,),
            in_specs=[in_spec, in_spec],
            out_specs=out_spec,
            compiler_params=pltpu.CompilerParams(
                dimension_semantics=("parallel",),
            ),
        )(p2, t2)

        total = total + jnp.sum(partials)

    # Mean with the negation folded in here (kernel accumulates the positive term).
    return (-total / jnp.float32(n)).astype(jnp.float32)


def _reference(y_pred, y_true):
    p = jnp.clip(y_pred.astype(jnp.float32), _EPS, 1.0 - _EPS)
    t = y_true.astype(jnp.float32)
    return jnp.mean(-(t * jnp.log(p) + (1.0 - t) * jnp.log(1.0 - p)))


if __name__ == "__main__":
    key = jax.random.PRNGKey(0)
    k1, k2 = jax.random.split(key)
    shape = (2, 4, 16, 16)  # NCHW, consistent with a typical segmentation output
    y_pred = jax.random.uniform(k1, shape, jnp.float32, minval=0.0, maxval=1.0)
    y_true = (jax.random.uniform(k2, shape, jnp.float32) > 0.5).astype(jnp.float32)

    out = bce_loss(y_pred, y_true)
    jax.block_until_ready(out)

    ref = _reference(y_pred, y_true)
    assert jnp.allclose(out, ref, rtol=1e-5, atol=1e-6), (out, ref)
    print("KERNEL_OK")
</pallas_src>

<mosaic_0001>
module attributes {stable_mosaic.version = 11 : i64} {
  func.func @kernel(%arg0: i32, %arg1: memref<16x128xf32, #tpu.memory_space<vmem>>, %arg2: memref<16x128xf32, #tpu.memory_space<vmem>>, %arg3: memref<1x8x128xf32, #tpu.memory_space<vmem>>) attributes {dimension_semantics = [#tpu.dimension_semantics<parallel>], iteration_bounds = array<i64: 1>, scalar_prefetch = 0 : i64, scratch_operands = 0 : i64, tpu.core_type = #tpu.core_type<tc>, window_params = [{transform_indices = @transform_0, window_bounds = array<i64: 16, 128>}, {transform_indices = @transform_1, window_bounds = array<i64: 16, 128>}, {transform_indices = @transform_2, window_bounds = array<i64: 1, 8, 128>}]} {
    %c0 = arith.constant 0 : index
    %c0_0 = arith.constant 0 : index
    %0 = vector.load %arg1[%c0, %c0_0] : memref<16x128xf32, #tpu.memory_space<vmem>>, vector<16x128xf32>
    %c0_1 = arith.constant 0 : index
    %c0_2 = arith.constant 0 : index
    %1 = vector.load %arg2[%c0_1, %c0_2] : memref<16x128xf32, #tpu.memory_space<vmem>>, vector<16x128xf32>
    %cst = arith.constant 1.000000e-07 : f32
    %cst_3 = arith.constant 0.99999988 : f32
    %2 = vector.broadcast %cst : f32 to vector<16x128xf32>
    %3 = arith.maximumf %2, %0 : vector<16x128xf32>
    %4 = vector.broadcast %cst_3 : f32 to vector<16x128xf32>
    %5 = arith.minimumf %4, %3 : vector<16x128xf32>
    %6 = math.log %5 : vector<16x128xf32>
    %7 = arith.mulf %1, %6 : vector<16x128xf32>
    %cst_4 = arith.constant 1.000000e+00 : f32
    %8 = vector.broadcast %cst_4 : f32 to vector<16x128xf32>
    %9 = arith.subf %8, %1 : vector<16x128xf32>
    %cst_5 = arith.constant 1.000000e+00 : f32
    %10 = vector.broadcast %cst_5 : f32 to vector<16x128xf32>
    %11 = arith.subf %10, %5 : vector<16x128xf32>
    %12 = math.log %11 : vector<16x128xf32>
    %13 = arith.mulf %9, %12 : vector<16x128xf32>
    %14 = arith.addf %7, %13 : vector<16x128xf32>
    %15 = vector.shape_cast %14 : vector<16x128xf32> to vector<2x8x128xf32>
    %cst_6 = arith.constant dense<0.000000e+00> : vector<8x128xf32>
    %16 = vector.multi_reduction <add>, %15, %cst_6 [0] : vector<2x8x128xf32> to vector<8x128xf32>
    %c0_7 = arith.constant 0 : index
    %c0_8 = arith.constant 0 : index
    %c0_9 = arith.constant 0 : index
    %17 = vector.load %arg3[%c0_7, %c0_8, %c0_9] : memref<1x8x128xf32, #tpu.memory_space<vmem>>, vector<1x8x128xf32>
    %18 = vector.shape_cast %17 : vector<1x8x128xf32> to vector<8x128xf32>
    %19 = vector.shape_cast %16 : vector<8x128xf32> to vector<1x8x128xf32>
    tpu.vector_store %arg3[%c0_7, %c0_8, %c0_9], %19 {strides = array<i32>} : memref<1x8x128xf32, #tpu.memory_space<vmem>>, vector<1x8x128xf32>,
    return
  }
  func.func @transform_0(%arg0: i32) -> (i32, i32) {
    %c0_i32 = arith.constant 0 : i32
    %c0_i32_0 = arith.constant 0 : i32
    return %arg0, %c0_i32 : i32, i32
  }
  func.func @transform_1(%arg0: i32) -> (i32, i32) {
    %c0_i32 = arith.constant 0 : i32
    %c0_i32_0 = arith.constant 0 : i32
    return %arg0, %c0_i32 : i32, i32
  }
  func.func @transform_2(%arg0: i32) -> (i32, i32, i32) {
    %c0_i32 = arith.constant 0 : i32
    %c0_i32_0 = arith.constant 0 : i32
    %c0_i32_1 = arith.constant 0 : i32
    return %arg0, %c0_i32, %c0_i32_0 : i32, i32, i32
  }
}

</mosaic_0001>

<llo_original>
// kernel: bce_loss.1
$region0: #{bce_loss.1}
  #allocation0 [shape = 'u32[]', space=smem, size = 0x4, offset = 0x4, fixed_abs, tag = 'smem constant byte address 0x4 - core index']
  #allocation1 [shape = 'u32[144,128]{1,0:T(1,128)}', space=vmem, size = 0x12000, scoped, tag = 'internal scratch']
  %s0 = inlined_call_operand.vmem [shape: f32[16,128], index: 0, kind: input, shape index: {}]
  %s1 = inlined_call_operand.vmem [shape: f32[16,128], index: 1, kind: input, shape index: {}]
  %s2 = inlined_call_operand.vmem [shape: f32[1,8,128], index: 2, kind: output, shape index: {}]
  %s3 = sld [smem:[#allocation0]]
  $region18: #{bce_loss.1} parent=0
    _
  %s5 = ssub.s32 1, %s3
  %s6 = scalar_select 0, %s5, %s3
  // Predicated region
  $region2: #{bce_loss.1} parent=0 // pred_check
    _
  $region3: #{bce_loss.1} parent=0 // pred_check_branch
    %8 = sbr.rel (0) target = $region5
  $region4: #{bce_loss.1} parent=0 // pred_region
    _
  $region5: #{bce_loss.1} parent=0 // pred_fallthru
    _
  // Predicated region
  $region6: #{bce_loss.1} parent=0 // pred_check
    _
  $region7: #{bce_loss.1} parent=0 // pred_check_branch
    %10 = sbr.rel (0) target = $region9
  $region8: #{bce_loss.1} parent=0 // pred_region
    _
  $region9: #{bce_loss.1} parent=0 // pred_fallthru
    _
  %v11 = vld [vmem:[%s0] sm:$0xff]
  %v12 = vld [vmem:[%s0 + $0x8] sm:$0xff]
  %v13 = vld [vmem:[%s1] sm:$0xff]
  %v14 = vld [vmem:[%s1 + $0x8] sm:$0xff]
  %v15 = vmax.f32 %v11, 1e-07
  %v16 = vmax.f32 %v12, 1e-07
  %v17 = vmin.f32 %v15, 0.9999999
  %v18 = vmin.f32 %v16, 0.9999999
  %v19 = vlog2.pop %v17
  %v20 = vmul.f32 %v19, 0.6931472
  %v21 = vlog2.pop %v18
  %v22 = vmul.f32 %v21, 0.6931472
  %v23 = vmul.f32 %v13, %v20
  %v24 = vmul.f32 %v14, %v22
  %v25 = vsub.f32 1.0, %v13
  %v26 = vsub.f32 1.0, %v14
  %v27 = vsub.f32 1.0, %v17
  %v28 = vsub.f32 1.0, %v18
  %v29 = vlog2.pop %v27
  %v30 = vmul.f32 %v29, 0.6931472
  %v31 = vlog2.pop %v28
  %v32 = vmul.f32 %v31, 0.6931472
  %v33 = vmul.f32 %v25, %v30
  %v34 = vmul.f32 %v26, %v32
  %v35 = vadd.f32 %v23, %v33
  %v36 = vadd.f32 %v24, %v34
  %v37 = vadd.f32 %v35, %v36
  %38 = vst [vmem:[%s2] sm:$0xff] %v37
  // Predicated region
  $region10: #{bce_loss.1} parent=0 // pred_check
    _
  $region11: #{bce_loss.1} parent=0 // pred_check_branch
    %40 = sbr.rel (0) target = $region13
  $region12: #{bce_loss.1} parent=0 // pred_region
    _
  $region13: #{bce_loss.1} parent=0 // pred_fallthru
    _
  // Predicated region
  $region14: #{bce_loss.1} parent=0 // pred_check
    _
  $region15: #{bce_loss.1} parent=0 // pred_check_branch
    %42 = sbr.rel (0) target = $region17
  $region16: #{bce_loss.1} parent=0 // pred_region
    _
  $region17: #{bce_loss.1} parent=0 // pred_fallthru
    _

</llo_original>
